<compile_context>
chip_gen: v6e
topology: v6e:2x2x1
jax: 0.10.0
libtpu: 0.0.40
codegen_flags: <defaults>
</compile_context>

<pallas_src>
import jax
import jax.numpy as jnp
from jax.experimental import pallas as pl
from jax.experimental.pallas import tpu as pltpu

LANE = 128    # every layer width is zero-padded to 128 lanes
TB_CAP = 512  # max batch-tile rows (well under VMEM on all generations incl. v7x 64 MiB)


def _round_up(v, m):
    return (v + m - 1) // m * m


def _cdiv(a, b):
    return (a + b - 1) // b


# ----------------------------------------------------------------------------
# Kernel: whole MLP (share stack + fused [actor | critic] head) on one batch tile.
# Weight/bias slabs are VMEM-resident across grid steps (constant index_map,
# single-buffered). Matmuls: bf16 operands, f32 accumulate. Elementwise: f32.
# ----------------------------------------------------------------------------
def _make_kernel(num_share_layers, k0):
    def kernel(x_ref, w_ref, b_ref, out_ref):
        # First share layer: K = k0 (sublane-aligned static slice of the slab).
        h = jnp.dot(
            x_ref[...].astype(jnp.bfloat16),
            w_ref[0, :k0, :],
            preferred_element_type=jnp.float32,
        )
        h = jnp.maximum(h + b_ref[0:1, :], 0.0)                 # bias + ReLU in f32
        for l in range(1, num_share_layers):                    # static unroll
            h = jnp.dot(h.astype(jnp.bfloat16), w_ref[l],
                        preferred_element_type=jnp.float32)
            h = jnp.maximum(h + b_ref[l:l + 1, :], 0.0)
        head = num_share_layers                                  # fused [actor | critic]
        out_ref[...] = (
            jnp.dot(h.astype(jnp.bfloat16), w_ref[head],
                    preferred_element_type=jnp.float32)
            + b_ref[head:head + 1, :]
        )
    return kernel


# ----------------------------------------------------------------------------
# Param packing: fuse heads, zero-pad every layer to 128x128, stack into slabs.
# ----------------------------------------------------------------------------
def pack_params(params):
    """params: [(W_share0,b0), ..., (W_shareN,bN), (W_critic,bc), (W_actor,ba)]
    with W shaped (in, out) and b shaped (1, out)."""
    *share, (wc, bc), (wa, ba) = params
    num_products = wa.shape[1]
    assert num_products + 1 <= LANE, \
        "fused [actor|critic] head must fit in one 128-lane output tile"

    w_head = jnp.concatenate([wa, wc], axis=1)   # (nn_out, num_products + 1)
    b_head = jnp.concatenate([ba, bc], axis=1)
    layers = list(share) + [(w_head, b_head)]
    L = len(layers)
    assert L <= 8

    w_slab = jnp.zeros((L, LANE, LANE), jnp.float32)
    b_slab = jnp.zeros((_round_up(L, 8), LANE), jnp.float32)
    for l, (W, b) in enumerate(layers):
        din, dout = W.shape
        # TODO(synk): for num_cus_types == 20 the module switches to w = [256, 256];
        # widths > 128 need a wider slab + K/N-tiled dots instead of this fast path.
        assert din <= LANE and dout <= LANE, \
            f"layer {l}: weight shape {W.shape} exceeds the 128-lane slab"
        w_slab = w_slab.at[l, :din, :dout].set(W)
        b_slab = b_slab.at[l, :dout].set(b[0])
    # bf16 weights: halves weight DMA/VMEM, 2-3x MXU throughput on v6e/v7x.
    return w_slab.astype(jnp.bfloat16), b_slab, num_products


def a2c_forward(x, w_slab, b_slab, num_products):
    """x: (B, in_dim) f32.  Returns (score (B, num_products), value (B, 1))."""
    B, in_dim = x.shape
    L = w_slab.shape[0]
    num_share = L - 1

    # Column padding only to a 16-sublane multiple (bf16 packing alignment for the
    # first-layer slab slice) — no 128-lane host-side round trip.
    in_dim_p = _round_up(in_dim, 16)
    assert in_dim_p <= LANE

    # Batch tile: big (up to 512 rows) but chosen so that batches larger than one
    # tile always yield >= 2 grid steps (keeps both v7x TensorCores busy).
    B8 = _round_up(B, 8)
    TB = min(TB_CAP, _round_up(_cdiv(B8, 2), 8))
    B_pad = _round_up(B8, TB)
    grid = (B_pad // TB,)

    if B_pad == B and in_dim_p == in_dim:
        x_pad = x
    else:
        x_pad = jnp.zeros((B_pad, in_dim_p), jnp.float32).at[:B, :in_dim].set(x)

    flops = 2 * B_pad * LANE * LANE * L
    bytes_accessed = (
        4 * B_pad * in_dim_p          # x (f32)
        + 2 * L * LANE * LANE         # weight slab (bf16)
        + 4 * b_slab.shape[0] * LANE  # bias slab (f32)
        + 4 * B_pad * LANE            # output (f32)
    )

    out = pl.pallas_call(
        _make_kernel(num_share, in_dim_p),
        out_shape=jax.ShapeDtypeStruct((B_pad, LANE), jnp.float32),
        grid_spec=pltpu.PrefetchScalarGridSpec(
            num_scalar_prefetch=0,
            grid=grid,
            in_specs=[
                # batch tile; last dim equals the full array dim (legal non-128 block)
                pl.BlockSpec((TB, in_dim_p), lambda i: (i, 0)),
                # resident weight slab: constant index_map -> single buffer
                pl.BlockSpec((L, LANE, LANE), lambda i: (0, 0, 0),
                             pipeline_mode=pl.Buffered(1)),
                # resident bias slab
                pl.BlockSpec(b_slab.shape, lambda i: (0, 0),
                             pipeline_mode=pl.Buffered(1)),
            ],
            out_specs=pl.BlockSpec((TB, LANE), lambda i: (i, 0)),
        ),
        compiler_params=pltpu.CompilerParams(
            dimension_semantics=("parallel",)),
        cost_estimate=pl.CostEstimate(
            flops=flops, transcendentals=0, bytes_accessed=bytes_accessed),
    )(x_pad, w_slab, b_slab)

    score = out[:B, :num_products]
    value = out[:B, num_products:num_products + 1]
    return score, value


# ----------------------------------------------------------------------------
# Deterministic parameter construction (mirrors module __init__ shapes).
# ----------------------------------------------------------------------------
def init_params(key, in_dim, w, nn_out, num_products):
    dims = [(in_dim, w[0])]
    for h in range(len(w) - 1):
        dims.append((w[h], w[h + 1]))
    dims.append((w[-1], nn_out))
    dims.append((nn_out, 1))             # critic
    dims.append((nn_out, num_products))  # actor (MLP=True)
    params = []
    for i, (din, dout) in enumerate(dims):
        kw, kb = jax.random.split(jax.random.fold_in(key, i))
        bound = 1.0 / (din ** 0.5)       # PyTorch Linear default init range
        W = jax.random.uniform(kw, (din, dout), jnp.float32, -bound, bound)
        b = jax.random.uniform(kb, (1, dout), jnp.float32, -bound, bound)
        params.append((W, b))
    return params


def reference_forward(x, params, bf16_operands=True):
    *share, (wc, bc), (wa, ba) = params

    def mm(a, w):
        if bf16_operands:
            return jnp.dot(a.astype(jnp.bfloat16), w.astype(jnp.bfloat16),
                           preferred_element_type=jnp.float32)
        return jnp.dot(a, w)

    h = x
    for (W, b) in share:
        h = jnp.maximum(mm(h, W) + b, 0.0)
    return mm(h, wa) + ba, mm(h, wc) + bc


if __name__ == "__main__":
    # Small synthetic "args": num_products=4, num_cus_types=4, t_embedding_dim=8,
    # h=2, w=[32, 32], nn_out=32, MLP=True.  Batch of 8 rollout states per call.
    num_products = 4
    num_cus_types = 4
    t_embedding_dim = 8
    w = [32, 32]
    nn_out = 32
    batch = 8
    in_dim = num_products + num_cus_types + t_embedding_dim  # 16

    key = jax.random.PRNGKey(0)
    k_x, k_p, k_e, k_seg = jax.random.split(key, 4)

    params = init_params(k_p, in_dim, w, nn_out, num_products)
    w_slab, b_slab, n_prod = pack_params(params)

    # Build the state the same way roll_out does: [inventory ratio | one-hot
    # customer type | t_embedding(arrivals)] — glue done in plain JAX.
    inv_ratio = jax.random.uniform(k_x, (batch, num_products), jnp.float32)
    seg = jax.random.randint(k_seg, (batch,), 0, num_cus_types)
    cus_onehot = jax.nn.one_hot(seg, num_cus_types, dtype=jnp.float32)
    ini_inv = 4
    emb_table = jax.random.normal(
        k_e, (ini_inv * num_products * 5, t_embedding_dim), jnp.float32
    )
    arrivals = jnp.array([3], dtype=jnp.int32)  # scalar "arrivals" counter
    t_emb = jnp.broadcast_to(emb_table[arrivals[0]], (batch, t_embedding_dim))
    x = jnp.concatenate([inv_ratio, cus_onehot, t_emb], axis=1)  # (8, 16)

    score, value = a2c_forward(x, w_slab, b_slab, n_prod)
    jax.block_until_ready((score, value))

    assert score.shape == (batch, num_products)
    assert value.shape == (batch, 1)

    # Tight check vs. a reference that emulates bf16 matmul operands (f32 accumulate).
    score_bf, value_bf = reference_forward(x, params, bf16_operands=True)
    assert jnp.allclose(score, score_bf, atol=5e-3, rtol=5e-3)
    assert jnp.allclose(value, value_bf, atol=5e-3, rtol=5e-3)

    # Loose sanity check vs. the pure f32 (PyTorch-semantics) reference.
    score_f32, value_f32 = reference_forward(x, params, bf16_operands=False)
    assert jnp.allclose(score, score_f32, atol=5e-2, rtol=5e-2)
    assert jnp.allclose(value, value_f32, atol=5e-2, rtol=5e-2)

    print("KERNEL_OK")
</pallas_src>

<mosaic_0001>
module attributes {stable_mosaic.version = 11 : i64} {
  func.func @kernel(%arg0: i32, %arg1: memref<8x16xf32, #tpu.memory_space<vmem>>, %arg2: memref<4x128x128xbf16, #tpu.memory_space<vmem>>, %arg3: memref<8x128xf32, #tpu.memory_space<vmem>>, %arg4: memref<8x128xf32, #tpu.memory_space<vmem>>) attributes {dimension_semantics = [#tpu.dimension_semantics<parallel>], iteration_bounds = array<i64: 1>, scalar_prefetch = 0 : i64, scratch_operands = 0 : i64, tpu.core_type = #tpu.core_type<tc>, window_params = [{transform_indices = @transform_0, window_bounds = array<i64: 8, 16>}, {pipeline_mode = #tpu.pipeline_mode<synchronous>, transform_indices = @transform_1, window_bounds = array<i64: 4, 128, 128>}, {pipeline_mode = #tpu.pipeline_mode<synchronous>, transform_indices = @transform_2, window_bounds = array<i64: 8, 128>}, {transform_indices = @transform_3, window_bounds = array<i64: 8, 128>}]} {
    %c0 = arith.constant 0 : index
    %c0_0 = arith.constant 0 : index
    %0 = vector.load %arg1[%c0, %c0_0] : memref<8x16xf32, #tpu.memory_space<vmem>>, vector<8x16xf32>
    %1 = arith.truncf %0 : vector<8x16xf32> to vector<8x16xbf16>
    %c0_1 = arith.constant 0 : index
    %c0_2 = arith.constant 0 : index
    %c0_3 = arith.constant 0 : index
    %2 = vector.load %arg2[%c0_1, %c0_2, %c0_3] : memref<4x128x128xbf16, #tpu.memory_space<vmem>>, vector<1x16x128xbf16>
    %3 = vector.shape_cast %2 : vector<1x16x128xbf16> to vector<16x128xbf16>
    %cst = arith.constant dense<0.000000e+00> : vector<8x128xf32>
    %4 = tpu.matmul %1, %3, %cst {dimension_numbers = #tpu.dot_dimension_numbers<[1], [0], [0], [1], [0, 0, 1, 1], [], []>} : vector<8x16xbf16>, vector<16x128xbf16>, vector<8x128xf32> -> vector<8x128xf32>
    %c0_4 = arith.constant 0 : index
    %c0_5 = arith.constant 0 : index
    %5 = vector.load %arg3[%c0_4, %c0_5] : memref<8x128xf32, #tpu.memory_space<vmem>>, vector<1x128xf32>
    %6 = vector.broadcast %5 : vector<1x128xf32> to vector<8x128xf32>
    %7 = arith.addf %4, %6 : vector<8x128xf32>
    %cst_6 = arith.constant 0.000000e+00 : f32
    %8 = vector.broadcast %cst_6 : f32 to vector<8x128xf32>
    %9 = arith.maximumf %7, %8 : vector<8x128xf32>
    %10 = arith.truncf %9 : vector<8x128xf32> to vector<8x128xbf16>
    %c1 = arith.constant 1 : index
    %c0_7 = arith.constant 0 : index
    %c0_8 = arith.constant 0 : index
    %11 = vector.load %arg2[%c1, %c0_7, %c0_8] : memref<4x128x128xbf16, #tpu.memory_space<vmem>>, vector<1x128x128xbf16>
    %12 = vector.shape_cast %11 : vector<1x128x128xbf16> to vector<128x128xbf16>
    %cst_9 = arith.constant dense<0.000000e+00> : vector<8x128xf32>
    %13 = tpu.matmul %10, %12, %cst_9 {dimension_numbers = #tpu.dot_dimension_numbers<[1], [0], [0], [1], [0, 0, 1, 1], [], []>} : vector<8x128xbf16>, vector<128x128xbf16>, vector<8x128xf32> -> vector<8x128xf32>
    %c1_10 = arith.constant 1 : index
    %c0_11 = arith.constant 0 : index
    %14 = vector.load %arg3[%c1_10, %c0_11] : memref<8x128xf32, #tpu.memory_space<vmem>>, vector<1x128xf32>
    %15 = vector.broadcast %14 : vector<1x128xf32> to vector<8x128xf32>
    %16 = arith.addf %13, %15 : vector<8x128xf32>
    %cst_12 = arith.constant 0.000000e+00 : f32
    %17 = vector.broadcast %cst_12 : f32 to vector<8x128xf32>
    %18 = arith.maximumf %16, %17 : vector<8x128xf32>
    %19 = arith.truncf %18 : vector<8x128xf32> to vector<8x128xbf16>
    %c2 = arith.constant 2 : index
    %c0_13 = arith.constant 0 : index
    %c0_14 = arith.constant 0 : index
    %20 = vector.load %arg2[%c2, %c0_13, %c0_14] : memref<4x128x128xbf16, #tpu.memory_space<vmem>>, vector<1x128x128xbf16>
    %21 = vector.shape_cast %20 : vector<1x128x128xbf16> to vector<128x128xbf16>
    %cst_15 = arith.constant dense<0.000000e+00> : vector<8x128xf32>
    %22 = tpu.matmul %19, %21, %cst_15 {dimension_numbers = #tpu.dot_dimension_numbers<[1], [0], [0], [1], [0, 0, 1, 1], [], []>} : vector<8x128xbf16>, vector<128x128xbf16>, vector<8x128xf32> -> vector<8x128xf32>
    %c2_16 = arith.constant 2 : index
    %c0_17 = arith.constant 0 : index
    %23 = vector.load %arg3[%c2_16, %c0_17] : memref<8x128xf32, #tpu.memory_space<vmem>>, vector<1x128xf32>
    %24 = vector.broadcast %23 : vector<1x128xf32> to vector<8x128xf32>
    %25 = arith.addf %22, %24 : vector<8x128xf32>
    %cst_18 = arith.constant 0.000000e+00 : f32
    %26 = vector.broadcast %cst_18 : f32 to vector<8x128xf32>
    %27 = arith.maximumf %25, %26 : vector<8x128xf32>
    %28 = arith.truncf %27 : vector<8x128xf32> to vector<8x128xbf16>
    %c3 = arith.constant 3 : index
    %c0_19 = arith.constant 0 : index
    %c0_20 = arith.constant 0 : index
    %29 = vector.load %arg2[%c3, %c0_19, %c0_20] : memref<4x128x128xbf16, #tpu.memory_space<vmem>>, vector<1x128x128xbf16>
    %30 = vector.shape_cast %29 : vector<1x128x128xbf16> to vector<128x128xbf16>
    %cst_21 = arith.constant dense<0.000000e+00> : vector<8x128xf32>
    %31 = tpu.matmul %28, %30, %cst_21 {dimension_numbers = #tpu.dot_dimension_numbers<[1], [0], [0], [1], [0, 0, 1, 1], [], []>} : vector<8x128xbf16>, vector<128x128xbf16>, vector<8x128xf32> -> vector<8x128xf32>
    %c3_22 = arith.constant 3 : index
    %c0_23 = arith.constant 0 : index
    %32 = vector.load %arg3[%c3_22, %c0_23] : memref<8x128xf32, #tpu.memory_space<vmem>>, vector<1x128xf32>
    %33 = vector.broadcast %32 : vector<1x128xf32> to vector<8x128xf32>
    %34 = arith.addf %31, %33 : vector<8x128xf32>
    %c0_24 = arith.constant 0 : index
    %c0_25 = arith.constant 0 : index
    %35 = vector.load %arg4[%c0_24, %c0_25] : memref<8x128xf32, #tpu.memory_space<vmem>>, vector<8x128xf32>
    tpu.vector_store %arg4[%c0_24, %c0_25], %34 {strides = array<i32>} : memref<8x128xf32, #tpu.memory_space<vmem>>, vector<8x128xf32>,
    return
  }
  func.func @transform_0(%arg0: i32) -> (i32, i32) {
    %c0_i32 = arith.constant 0 : i32
    %c0_i32_0 = arith.constant 0 : i32
    return %arg0, %c0_i32 : i32, i32
  }
  func.func @transform_1(%arg0: i32) -> (i32, i32, i32) {
    %c0_i32 = arith.constant 0 : i32
    %c0_i32_0 = arith.constant 0 : i32
    %c0_i32_1 = arith.constant 0 : i32
    %c0_i32_2 = arith.constant 0 : i32
    return %c0_i32, %c0_i32_0, %c0_i32_1 : i32, i32, i32
  }
  func.func @transform_2(%arg0: i32) -> (i32, i32) {
    %c0_i32 = arith.constant 0 : i32
    %c0_i32_0 = arith.constant 0 : i32
    %c0_i32_1 = arith.constant 0 : i32
    return %c0_i32, %c0_i32_0 : i32, i32
  }
  func.func @transform_3(%arg0: i32) -> (i32, i32) {
    %c0_i32 = arith.constant 0 : i32
    %c0_i32_0 = arith.constant 0 : i32
    return %arg0, %c0_i32 : i32, i32
  }
}

</mosaic_0001>

<llo_original>
// kernel: tpu_custom_call.1
$region0: #{tpu_custom_call.1}
  #allocation0 [shape = 'u32[]', space=smem, size = 0x4, offset = 0x4, fixed_abs, tag = 'smem constant byte address 0x4 - core index']
  #allocation1 [shape = 'u32[144,128]{1,0:T(1,128)}', space=vmem, size = 0x12000, scoped, tag = 'internal scratch']
  %s0 = inlined_call_operand.hbm [shape: f32[8,16], index: 0, kind: input, shape index: {}]
  %s1 = inlined_call_operand.hbm [shape: bf16[4,128,128], index: 1, kind: input, shape index: {}]
  %s2 = inlined_call_operand.hbm [shape: f32[8,128], index: 2, kind: input, shape index: {}]
  %s3 = inlined_call_operand.hbm [shape: f32[8,128], index: 3, kind: output, shape index: {}]
  %s4 = sld [smem:[#allocation0]]
  $region34: #{tpu_custom_call.1} parent=0
    _
  %s6 = ssub.s32 1, %s4
  %s7 = scalar_select 0, %s6, %s4
  $region1: #{tpu_custom_call.1} parent=0
    #allocation2 [shape = 'u8[4096]{0}', space=vmem, size = 0x1000, scoped, tag = 'input window, operand 0, single buffered']
    #allocation3 [shape = 's32[1]{0}', space=sflag, size = 0x4, scoped, tag = 'scoped memory for tpu_custom_call.1']
    #allocation4 [shape = 's32[1]{0}', space=sflag, size = 0x4, scoped, tag = 'scoped memory for tpu_custom_call.1']
    #allocation5 [shape = 'u8[131072]{0}', space=vmem, size = 0x20000, scoped, tag = 'input window, operand 1, single buffered']
    #allocation6 [shape = 's32[1]{0}', space=sflag, size = 0x4, scoped, tag = 'scoped memory for tpu_custom_call.1']
    #allocation7 [shape = 'u8[4096]{0}', space=vmem, size = 0x1000, scoped, tag = 'input window, operand 2, single buffered']
    #allocation8 [shape = 'u8[4096]{0}', space=vmem, size = 0x1000, scoped, tag = 'output window, operand 0, single buffered']
    %8 = vsyncpa [#allocation3], 0
    %9 = vsyncpa [#allocation6], 0
    %10 = vsyncpa [#allocation4], 0
    // Predicated region
    $region2: #{tpu_custom_call.1} parent=1 // pred_check
      _
    $region3: #{tpu_custom_call.1} parent=1 // pred_check_branch
      %12 = sbr.rel (0) target = $region5
    $region4: #{tpu_custom_call.1} parent=1 // pred_region
      %s14 = ssub.s32 128, 128
      %15 = vsyncadd [#allocation3], %s14
      %s17 = sshll.u32 [#allocation2], 4
      %s18 = int_to_ptr.vmem [resolvable:$true] %s17
      %20 = dma.hbm_to_vmem [thread:$0]  %s0, 128, %s18, [#allocation3]
    $region5: #{tpu_custom_call.1} parent=1 // pred_fallthru
      _
    // Predicated region
    $region6: #{tpu_custom_call.1} parent=1 // pred_check
      _
    $region7: #{tpu_custom_call.1} parent=1 // pred_check_branch
      %22 = sbr.rel (0) target = $region9
    $region8: #{tpu_custom_call.1} parent=1 // pred_region
      %s24 = ssub.s32 4096, 4096
      %25 = vsyncadd [#allocation6], %s24
      %s26 = sshll.u32 [#allocation5], 4
      %s27 = int_to_ptr.vmem [resolvable:$true] %s26
      %32 = dma.hbm_to_vmem [thread:$0]  %s1, 4096, %s27, [#allocation6], 64, 64, 4
    $region9: #{tpu_custom_call.1} parent=1 // pred_fallthru
      _
    // Predicated region
    $region10: #{tpu_custom_call.1} parent=1 // pred_check
      _
    $region11: #{tpu_custom_call.1} parent=1 // pred_check_branch
      %34 = sbr.rel (0) target = $region13
    $region12: #{tpu_custom_call.1} parent=1 // pred_region
      %s36 = ssub.s32 128, 128
      %37 = vsyncadd [#allocation6], %s36
      %s39 = sshll.u32 [#allocation7], 4
      %s40 = int_to_ptr.vmem [resolvable:$true] %s39
      %42 = dma.hbm_to_vmem [thread:$0]  %s2, 128, %s40, [#allocation6]
    $region13: #{tpu_custom_call.1} parent=1 // pred_fallthru
      _
    // Predicated region
    $region14: #{tpu_custom_call.1} parent=1 // pred_check
      _
    $region15: #{tpu_custom_call.1} parent=1 // pred_check_branch
      %44 = sbr.rel (0) target = $region17
    $region16: #{tpu_custom_call.1} parent=1 // pred_region
      %45 = dma.done [#allocation3], 128
    $region17: #{tpu_custom_call.1} parent=1 // pred_fallthru
      _
    // Predicated region
    $region18: #{tpu_custom_call.1} parent=1 // pred_check
      _
    $region19: #{tpu_custom_call.1} parent=1 // pred_check_branch
      %47 = sbr.rel (0) target = $region21
    $region20: #{tpu_custom_call.1} parent=1 // pred_region
      %48 = dma.done [#allocation6], 4096
    $region21: #{tpu_custom_call.1} parent=1 // pred_fallthru
      _
    // Predicated region
    $region22: #{tpu_custom_call.1} parent=1 // pred_check
      _
    $region23: #{tpu_custom_call.1} parent=1 // pred_check_branch
      %50 = sbr.rel (0) target = $region25
    $region24: #{tpu_custom_call.1} parent=1 // pred_region
      %51 = dma.done [#allocation6], 128
    $region25: #{tpu_custom_call.1} parent=1 // pred_fallthru
      _
    %v53 = vld [vmem:[#allocation2] sm:$0xff]
    %v54 = vpack.c.bf16 %v53, %v53
    %v55 = vld [vmem:[#allocation5] sm:$0xf]
    %v56 = vld [vmem:[#allocation5 + $0x4] sm:$0xf]
    %v57 = vld [vmem:[#allocation7] sm:$0x1]
    %v58 = vlaneseq
    %v59 = vshrl.u32 %v58, 7
    %v60 = vsub.s32 0, %v59
    %v61 = vrot.slane %v57, %v60
    %v64 = vunpack.c.l.b16 %v55
    %v65 = vunpack.c.l.b16 %v56
    %v66 = vpack.c.b16 %v65, %v64
    %vm68 = vcmask 130048
    %v70 = vsel %vm68, %v54, 0
    %72 = vmatprep.subr.bf16.mxu0 0
    %73 = vmatpush1.bf16.msra.mxu0 0
    %74 = vmatprep.subr.bf16.mxu0 0
    %75 = vmatpush1.bf16.msra.mxu0 0
    %76 = vmatprep.subr.bf16.mxu0 0
    %77 = vmatpush1.bf16.msra.mxu0 0
    %78 = vmatprep.subr.bf16.mxu0 0
    %79 = vmatpush1.bf16.msra.mxu0 0
    %80 = vmatprep.subr.bf16.mxu0 0
    %81 = vmatpush1.bf16.msra.mxu0 0
    %82 = vmatprep.subr.bf16.mxu0 0
    %83 = vmatpush1.bf16.msra.mxu0 0
    %84 = vmatprep.subr.bf16.mxu0 0
    %85 = vmatpush1.bf16.msra.mxu0 0
    %86 = vmatprep.subr.bf16.mxu0 0
    %87 = vmatpush1.bf16.msra.mxu0 %v66
    %88 = vmatprep.subr.bf16.mxu0 0
    %89 = vmatpush2.bf16.msra.mxu0 0
    %90 = vmatprep.subr.bf16.mxu0 0
    %91 = vmatpush2.bf16.msra.mxu0 0
    %92 = vmatprep.subr.bf16.mxu0 0
    %93 = vmatpush2.bf16.msra.mxu0 0
    %94 = vmatprep.subr.bf16.mxu0 0
    %95 = vmatpush2.bf16.msra.mxu0 0
    %96 = vmatprep.subr.bf16.mxu0 0
    %97 = vmatpush2.bf16.msra.mxu0 0
    %98 = vmatprep.subr.bf16.mxu0 0
    %99 = vmatpush2.bf16.msra.mxu0 0
    %100 = vmatprep.subr.bf16.mxu0 0
    %101 = vmatpush2.bf16.msra.mxu0 0
    %102 = vmatprep.subr.bf16.mxu0 0
    %103 = vmatpush2.bf16.msra.mxu0 0
    %104 = vmatprep.mubr.bf16.mxu0 0
    %105 = vmatmul.mubr.bf16.gmra.mxu0 %v70
    %v106 = vpop.f32.mrf.mxu0
    %v107 = vadd.f32 %v61, %v106
    %v108 = vpop.f32.mrf.mxu0
    %v109 = vpop.f32.mrf.mxu0
    %v110 = vpop.f32.mrf.mxu0
    %111 = vdwg.mxu0
    %v112 = vmax.f32 %v107, 0.0
    %v113 = vpack.c.bf16 %v112, %v112
    %s114 = scalar_lea.vmem [#allocation5], 64
    %v115 = vld [vmem:[%s114] sm:$0xf]
    %v116 = vld [vmem:[%s114 + $0x4] sm:$0xf]
    %v117 = vld [vmem:[%s114 + $0x8] sm:$0xf]
    %v118 = vld [vmem:[%s114 + $0xc] sm:$0xf]
    %v119 = vld [vmem:[%s114 + $0x10] sm:$0xf]
    %v120 = vld [vmem:[%s114 + $0x14] sm:$0xf]
    %v121 = vld [vmem:[%s114 + $0x18] sm:$0xf]
    %v122 = vld [vmem:[%s114 + $0x1c] sm:$0xf]
    %v123 = vld [vmem:[%s114 + $0x20] sm:$0xf]
    %v124 = vld [vmem:[%s114 + $0x24] sm:$0xf]
    %v125 = vld [vmem:[%s114 + $0x28] sm:$0xf]
    %v126 = vld [vmem:[%s114 + $0x2c] sm:$0xf]
    %v127 = vld [vmem:[%s114 + $0x30] sm:$0xf]
    %v128 = vld [vmem:[%s114 + $0x34] sm:$0xf]
    %v129 = vld [vmem:[%s114 + $0x38] sm:$0xf]
    %v130 = vld [vmem:[%s114 + $0x3c] sm:$0xf]
    %v131 = vld [vmem:[#allocation7 + $0x1] sm:$0x1]
    %v132 = vlaneseq
    %v133 = vshrl.u32 %v132, 7
    %v134 = vsub.s32 0, %v133
    %v135 = vrot.slane %v131, %v134
    %v152 = vunpack.c.l.b16 %v115
    %v153 = vunpack.c.l.b16 %v116
    %v154 = vunpack.c.l.b16 %v117
    %v155 = vunpack.c.l.b16 %v118
    %v156 = vunpack.c.l.b16 %v119
    %v157 = vunpack.c.l.b16 %v120
    %v158 = vunpack.c.l.b16 %v121
    %v159 = vunpack.c.l.b16 %v122
    %v160 = vunpack.c.l.b16 %v123
    %v161 = vunpack.c.l.b16 %v124
    %v162 = vunpack.c.l.b16 %v125
    %v163 = vunpack.c.l.b16 %v126
    %v164 = vunpack.c.l.b16 %v127
    %v165 = vunpack.c.l.b16 %v128
    %v166 = vunpack.c.l.b16 %v129
    %v167 = vunpack.c.l.b16 %v130
    %v168 = vpack.c.b16 %v153, %v152
    %v169 = vpack.c.b16 %v155, %v154
    %v170 = vpack.c.b16 %v157, %v156
    %v171 = vpack.c.b16 %v159, %v158
    %v172 = vpack.c.b16 %v161, %v160
    %v173 = vpack.c.b16 %v163, %v162
    %v174 = vpack.c.b16 %v165, %v164
    %v175 = vpack.c.b16 %v167, %v166
    %184 = vmatprep.subr.bf16.mxu0 0
    %185 = vmatpush1.bf16.msra.mxu0 %v175
    %186 = vmatprep.subr.bf16.mxu0 0
    %187 = vmatpush1.bf16.msra.mxu0 %v174
    %188 = vmatprep.subr.bf16.mxu0 0
    %189 = vmatpush1.bf16.msra.mxu0 %v173
    %190 = vmatprep.subr.bf16.mxu0 0
    %191 = vmatpush1.bf16.msra.mxu0 %v172
    %192 = vmatprep.subr.bf16.mxu0 0
    %193 = vmatpush1.bf16.msra.mxu0 %v171
    %194 = vmatprep.subr.bf16.mxu0 0
    %195 = vmatpush1.bf16.msra.mxu0 %v170
    %196 = vmatprep.subr.bf16.mxu0 0
    %197 = vmatpush1.bf16.msra.mxu0 %v169
    %198 = vmatprep.subr.bf16.mxu0 0
    %199 = vmatpush1.bf16.msra.mxu0 %v168
    %200 = vmatprep.subr.bf16.mxu0 0
    %201 = vmatpush2.bf16.msra.mxu0 0
    %202 = vmatprep.subr.bf16.mxu0 0
    %203 = vmatpush2.bf16.msra.mxu0 0
    %204 = vmatprep.subr.bf16.mxu0 0
    %205 = vmatpush2.bf16.msra.mxu0 0
    %206 = vmatprep.subr.bf16.mxu0 0
    %207 = vmatpush2.bf16.msra.mxu0 0
    %208 = vmatprep.subr.bf16.mxu0 0
    %209 = vmatpush2.bf16.msra.mxu0 0
    %210 = vmatprep.subr.bf16.mxu0 0
    %211 = vmatpush2.bf16.msra.mxu0 0
    %212 = vmatprep.subr.bf16.mxu0 0
    %213 = vmatpush2.bf16.msra.mxu0 0
    %214 = vmatprep.subr.bf16.mxu0 0
    %215 = vmatpush2.bf16.msra.mxu0 0
    %216 = vmatprep.mubr.bf16.mxu0 0
    %217 = vmatmul.mubr.bf16.gmra.mxu0 %v113
    %v218 = vpop.f32.mrf.mxu0
    %v219 = vadd.f32 %v135, %v218
    %v220 = vpop.f32.mrf.mxu0
    %v221 = vpop.f32.mrf.mxu0
    %v222 = vpop.f32.mrf.mxu0
    %223 = vdwg.mxu0
    %v224 = vmax.f32 %v219, 0.0
    %v225 = vpack.c.bf16 %v224, %v224
    %s226 = scalar_lea.vmem [#allocation5], 128
    %v227 = vld [vmem:[%s226] sm:$0xf]
    %v228 = vld [vmem:[%s226 + $0x4] sm:$0xf]
    %v229 = vld [vmem:[%s226 + $0x8] sm:$0xf]
    %v230 = vld [vmem:[%s226 + $0xc] sm:$0xf]
    %v231 = vld [vmem:[%s226 + $0x10] sm:$0xf]
    %v232 = vld [vmem:[%s226 + $0x14] sm:$0xf]
    %v233 = vld [vmem:[%s226 + $0x18] sm:$0xf]
    %v234 = vld [vmem:[%s226 + $0x1c] sm:$0xf]
    %v235 = vld [vmem:[%s226 + $0x20] sm:$0xf]
    %v236 = vld [vmem:[%s226 + $0x24] sm:$0xf]
    %v237 = vld [vmem:[%s226 + $0x28] sm:$0xf]
    %v238 = vld [vmem:[%s226 + $0x2c] sm:$0xf]
    %v239 = vld [vmem:[%s226 + $0x30] sm:$0xf]
    %v240 = vld [vmem:[%s226 + $0x34] sm:$0xf]
    %v241 = vld [vmem:[%s226 + $0x38] sm:$0xf]
    %v242 = vld [vmem:[%s226 + $0x3c] sm:$0xf]
    %v243 = vld [vmem:[#allocation7 + $0x2] sm:$0x1]
    %v244 = vlaneseq
    %v245 = vshrl.u32 %v244, 7
    %v246 = vsub.s32 0, %v245
    %v247 = vrot.slane %v243, %v246
    %v264 = vunpack.c.l.b16 %v227
    %v265 = vunpack.c.l.b16 %v228
    %v266 = vunpack.c.l.b16 %v229
    %v267 = vunpack.c.l.b16 %v230
    %v268 = vunpack.c.l.b16 %v231
    %v269 = vunpack.c.l.b16 %v232
    %v270 = vunpack.c.l.b16 %v233
    %v271 = vunpack.c.l.b16 %v234
    %v272 = vunpack.c.l.b16 %v235
    %v273 = vunpack.c.l.b16 %v236
    %v274 = vunpack.c.l.b16 %v237
    %v275 = vunpack.c.l.b16 %v238
    %v276 = vunpack.c.l.b16 %v239
    %v277 = vunpack.c.l.b16 %v240
    %v278 = vunpack.c.l.b16 %v241
    %v279 = vunpack.c.l.b16 %v242
    %v280 = vpack.c.b16 %v265, %v264
    %v281 = vpack.c.b16 %v267, %v266
    %v282 = vpack.c.b16 %v269, %v268
    %v283 = vpack.c.b16 %v271, %v270
    %v284 = vpack.c.b16 %v273, %v272
    %v285 = vpack.c.b16 %v275, %v274
    %v286 = vpack.c.b16 %v277, %v276
    %v287 = vpack.c.b16 %v279, %v278
    %296 = vmatprep.subr.bf16.mxu0 0
    %297 = vmatpush1.bf16.msra.mxu0 %v287
    %298 = vmatprep.subr.bf16.mxu0 0
    %299 = vmatpush1.bf16.msra.mxu0 %v286
    %300 = vmatprep.subr.bf16.mxu0 0
    %301 = vmatpush1.bf16.msra.mxu0 %v285
    %302 = vmatprep.subr.bf16.mxu0 0
    %303 = vmatpush1.bf16.msra.mxu0 %v284
    %304 = vmatprep.subr.bf16.mxu0 0
    %305 = vmatpush1.bf16.msra.mxu0 %v283
    %306 = vmatprep.subr.bf16.mxu0 0
    %307 = vmatpush1.bf16.msra.mxu0 %v282
    %308 = vmatprep.subr.bf16.mxu0 0
    %309 = vmatpush1.bf16.msra.mxu0 %v281
    %310 = vmatprep.subr.bf16.mxu0 0
    %311 = vmatpush1.bf16.msra.mxu0 %v280
    %312 = vmatprep.subr.bf16.mxu0 0
    %313 = vmatpush2.bf16.msra.mxu0 0
    %314 = vmatprep.subr.bf16.mxu0 0
    %315 = vmatpush2.bf16.msra.mxu0 0
    %316 = vmatprep.subr.bf16.mxu0 0
    %317 = vmatpush2.bf16.msra.mxu0 0
    %318 = vmatprep.subr.bf16.mxu0 0
    %319 = vmatpush2.bf16.msra.mxu0 0
    %320 = vmatprep.subr.bf16.mxu0 0
    %321 = vmatpush2.bf16.msra.mxu0 0
    %322 = vmatprep.subr.bf16.mxu0 0
    %323 = vmatpush2.bf16.msra.mxu0 0
    %324 = vmatprep.subr.bf16.mxu0 0
    %325 = vmatpush2.bf16.msra.mxu0 0
    %326 = vmatprep.subr.bf16.mxu0 0
    %327 = vmatpush2.bf16.msra.mxu0 0
    %328 = vmatprep.mubr.bf16.mxu0 0
    %329 = vmatmul.mubr.bf16.gmra.mxu0 %v225
    %v330 = vpop.f32.mrf.mxu0
    %v331 = vadd.f32 %v247, %v330
    %v332 = vpop.f32.mrf.mxu0
    %v333 = vpop.f32.mrf.mxu0
    %v334 = vpop.f32.mrf.mxu0
    %335 = vdwg.mxu0
    %v336 = vmax.f32 %v331, 0.0
    %v337 = vpack.c.bf16 %v336, %v336
    %s338 = scalar_lea.vmem [#allocation5], 192
    %v339 = vld [vmem:[%s338] sm:$0xf]
    %v340 = vld [vmem:[%s338 + $0x4] sm:$0xf]
    %v341 = vld [vmem:[%s338 + $0x8] sm:$0xf]
    %v342 = vld [vmem:[%s338 + $0xc] sm:$0xf]
    %v343 = vld [vmem:[%s338 + $0x10] sm:$0xf]
    %v344 = vld [vmem:[%s338 + $0x14] sm:$0xf]
    %v345 = vld [vmem:[%s338 + $0x18] sm:$0xf]
    %v346 = vld [vmem:[%s338 + $0x1c] sm:$0xf]
    %v347 = vld [vmem:[%s338 + $0x20] sm:$0xf]
    %v348 = vld [vmem:[%s338 + $0x24] sm:$0xf]
    %v349 = vld [vmem:[%s338 + $0x28] sm:$0xf]
    %v350 = vld [vmem:[%s338 + $0x2c] sm:$0xf]
    %v351 = vld [vmem:[%s338 + $0x30] sm:$0xf]
    %v352 = vld [vmem:[%s338 + $0x34] sm:$0xf]
    %v353 = vld [vmem:[%s338 + $0x38] sm:$0xf]
    %v354 = vld [vmem:[%s338 + $0x3c] sm:$0xf]
    %v355 = vld [vmem:[#allocation7 + $0x3] sm:$0x1]
    %v356 = vlaneseq
    %v357 = vshrl.u32 %v356, 7
    %v358 = vsub.s32 0, %v357
    %v359 = vrot.slane %v355, %v358
    %v376 = vunpack.c.l.b16 %v339
    %v377 = vunpack.c.l.b16 %v340
    %v378 = vunpack.c.l.b16 %v341
    %v379 = vunpack.c.l.b16 %v342
    %v380 = vunpack.c.l.b16 %v343
    %v381 = vunpack.c.l.b16 %v344
    %v382 = vunpack.c.l.b16 %v345
    %v383 = vunpack.c.l.b16 %v346
    %v384 = vunpack.c.l.b16 %v347
    %v385 = vunpack.c.l.b16 %v348
    %v386 = vunpack.c.l.b16 %v349
    %v387 = vunpack.c.l.b16 %v350
    %v388 = vunpack.c.l.b16 %v351
    %v389 = vunpack.c.l.b16 %v352
    %v390 = vunpack.c.l.b16 %v353
    %v391 = vunpack.c.l.b16 %v354
    %v392 = vpack.c.b16 %v377, %v376
    %v393 = vpack.c.b16 %v379, %v378
    %v394 = vpack.c.b16 %v381, %v380
    %v395 = vpack.c.b16 %v383, %v382
    %v396 = vpack.c.b16 %v385, %v384
    %v397 = vpack.c.b16 %v387, %v386
    %v398 = vpack.c.b16 %v389, %v388
    %v399 = vpack.c.b16 %v391, %v390
    %408 = vmatprep.subr.bf16.mxu0 0
    %409 = vmatpush1.bf16.msra.mxu0 %v399
    %410 = vmatprep.subr.bf16.mxu0 0
    %411 = vmatpush1.bf16.msra.mxu0 %v398
    %412 = vmatprep.subr.bf16.mxu0 0
    %413 = vmatpush1.bf16.msra.mxu0 %v397
    %414 = vmatprep.subr.bf16.mxu0 0
    %415 = vmatpush1.bf16.msra.mxu0 %v396
    %416 = vmatprep.subr.bf16.mxu0 0
    %417 = vmatpush1.bf16.msra.mxu0 %v395
    %418 = vmatprep.subr.bf16.mxu0 0
    %419 = vmatpush1.bf16.msra.mxu0 %v394
    %420 = vmatprep.subr.bf16.mxu0 0
    %421 = vmatpush1.bf16.msra.mxu0 %v393
    %422 = vmatprep.subr.bf16.mxu0 0
    %423 = vmatpush1.bf16.msra.mxu0 %v392
    %424 = vmatprep.subr.bf16.mxu0 0
    %425 = vmatpush2.bf16.msra.mxu0 0
    %426 = vmatprep.subr.bf16.mxu0 0
    %427 = vmatpush2.bf16.msra.mxu0 0
    %428 = vmatprep.subr.bf16.mxu0 0
    %429 = vmatpush2.bf16.msra.mxu0 0
    %430 = vmatprep.subr.bf16.mxu0 0
    %431 = vmatpush2.bf16.msra.mxu0 0
    %432 = vmatprep.subr.bf16.mxu0 0
    %433 = vmatpush2.bf16.msra.mxu0 0
    %434 = vmatprep.subr.bf16.mxu0 0
    %435 = vmatpush2.bf16.msra.mxu0 0
    %436 = vmatprep.subr.bf16.mxu0 0
    %437 = vmatpush2.bf16.msra.mxu0 0
    %438 = vmatprep.subr.bf16.mxu0 0
    %439 = vmatpush2.bf16.msra.mxu0 0
    %440 = vmatprep.mubr.bf16.mxu0 0
    %441 = vmatmul.mubr.bf16.gmra.mxu0 %v337
    %v442 = vpop.f32.mrf.mxu0
    %v443 = vadd.f32 %v359, %v442
    %v444 = vpop.f32.mrf.mxu0
    %v445 = vpop.f32.mrf.mxu0
    %v446 = vpop.f32.mrf.mxu0
    %447 = vdwg.mxu0
    %448 = vst [vmem:[#allocation8] sm:$0xff] %v443
    // Predicated region
    $region26: #{tpu_custom_call.1} parent=1 // pred_check
      _
    $region27: #{tpu_custom_call.1} parent=1 // pred_check_branch
      %450 = sbr.rel (0) target = $region29
    $region28: #{tpu_custom_call.1} parent=1 // pred_region
      %s452 = ssub.s32 128, 128
      %453 = vsyncadd [#allocation4], %s452
      %s455 = sshll.u32 [#allocation8], 4
      %s456 = int_to_ptr.vmem [resolvable:$true] %s455
      %458 = dma.vmem_to_hbm [thread:$0]  %s456, 128, %s3, [#allocation4]
    $region29: #{tpu_custom_call.1} parent=1 // pred_fallthru
      _
    // Predicated region
    $region30: #{tpu_custom_call.1} parent=1 // pred_check
      _
    $region31: #{tpu_custom_call.1} parent=1 // pred_check_branch
      %460 = sbr.rel (0) target = $region33
    $region32: #{tpu_custom_call.1} parent=1 // pred_region
      %461 = dma.done [#allocation4], 128
    $region33: #{tpu_custom_call.1} parent=1 // pred_fallthru
      _
    %462 = vsyncpa [#allocation3], 1
    %463 = vsyncpa [#allocation6], 1
    %464 = vsyncpa [#allocation4], 1

</llo_original>
